<compile_context>
chip_gen: v7x
topology: tpu7x:2x2x1
jax: 0.10.0
libtpu: 0.0.40
codegen_flags: <defaults>
</compile_context>

<pallas_src>
import math

import jax
import jax.numpy as jnp
import numpy as np
from jax.experimental import pallas as pl
from jax.experimental.pallas import tpu as pltpu


def _round_up(x: int, m: int) -> int:
    return ((x + m - 1) // m) * m


# ---------------------------------------------------------------------------
# Fused sin/cos: one shared range reduction, both polynomials, quadrant select.
# 3-term Cody-Waite split of pi/2 (cephes DP1/DP2/DP3 doubled): k*PIO2_HI and
# k*PIO2_MED are exact in f32 for the k ranges seen by time/noise embeddings.
# TODO(synk): huge arguments (|x| >~ 1e5) would need Payne-Hanek reduction.
# ---------------------------------------------------------------------------
_TWO_OVER_PI = 0.6366197723675814
_PIO2_HI = 1.5703125                    # 8-bit mantissa
_PIO2_MED = 4.837512969970703125e-4     # 11-bit mantissa
_PIO2_LO = 7.54978995489188216e-8


def _sincos(x):
    # Shared range reduction: x = k*(pi/2) + r, r in [-pi/4, pi/4].
    k = jnp.floor(x * _TWO_OVER_PI + 0.5)
    r = x - k * _PIO2_HI
    r = r - k * _PIO2_MED
    r = r - k * _PIO2_LO
    r2 = r * r
    # Minimax polynomials on [-pi/4, pi/4] (cephes sinf / cosf coefficients).
    sin_r = r + r * r2 * (-1.6666654611e-1
                          + r2 * (8.3321608736e-3 + r2 * (-1.9515295891e-4)))
    cos_r = 1.0 - 0.5 * r2 + r2 * r2 * (4.166664568298827e-2
                                        + r2 * (-1.388731625493765e-3
                                                + r2 * 2.443315711809948e-5))
    j = k.astype(jnp.int32) & 3                   # quadrant (works for k < 0 too)
    s = jnp.where(j == 0, sin_r,
        jnp.where(j == 1, cos_r,
        jnp.where(j == 2, -sin_r, -cos_r)))
    c = jnp.where(j == 0, cos_r,
        jnp.where(j == 1, -sin_r,
        jnp.where(j == 2, -cos_r, sin_r)))
    return s, c


def _sinusoidal_kernel_aligned(t_ref, freq_ref, out_ref):
    # half_dim % 128 == 0: two 128-aligned slice stores into one (TB, dim) tile.
    emb = t_ref[...] * freq_ref[...]              # (TB,1)*(1,H) -> (TB,H), once
    s, c = _sincos(emb)
    h = freq_ref.shape[-1]
    out_ref[:, :h] = s.astype(out_ref.dtype)      # unmasked vst, overlaps cos work
    out_ref[:, h:] = c.astype(out_ref.dtype)


def _sinusoidal_kernel_split(t_ref, freq_ref, sin_ref, cos_ref):
    # half_dim not lane-aligned: two separate outputs; concat happens in XLA.
    emb = t_ref[...] * freq_ref[...]
    s, c = _sincos(emb)
    sin_ref[...] = s.astype(sin_ref.dtype)
    cos_ref[...] = c.astype(cos_ref.dtype)


def sinusoidal_embedding(
    in_tensor: jax.Array,
    frequencies: jax.Array,
    *,
    block_b: int = 1024,
    out_dtype=jnp.float32,
) -> jax.Array:
    """in_tensor: (B, 1) or (B,) f32; frequencies: (half_dim,) f32 -> (B, 2*half_dim)."""
    t = jnp.asarray(in_tensor, jnp.float32).reshape(-1, 1)
    B = t.shape[0]
    half_dim = int(frequencies.shape[-1])
    dim = 2 * half_dim
    freq2d = jnp.asarray(frequencies, jnp.float32).reshape(1, half_dim)
    out_itemsize = jnp.dtype(out_dtype).itemsize

    # Batch tile: aim for >=2 grid steps (v7x megacore sharding), cap at block_b,
    # and clamp to a conservative VMEM budget (double-buffered output tile plus
    # ~2x f32 live intermediates per row).  Ragged last block handled by Pallas.
    tb = min(block_b, max(8, _round_up((B + 1) // 2, 8)))
    vmem_budget = 24 << 20                                   # fits v7x scoped default
    per_row_bytes = dim * out_itemsize * 2 + dim * 4 * 2
    tb = min(tb, max(8, (vmem_budget // per_row_bytes) // 8 * 8))
    grid = (pl.cdiv(B, tb),)

    in_specs = [
        pl.BlockSpec((tb, 1), lambda i: (i, 0)),             # per-tile t column
        pl.BlockSpec((1, half_dim), lambda i: (0, 0)),       # resident frequencies
    ]
    cparams = pltpu.CompilerParams(dimension_semantics=("parallel",))
    cost = pl.CostEstimate(
        flops=30 * B * half_dim,
        transcendentals=2 * B * half_dim,
        bytes_accessed=B * dim * out_itemsize + B * 4 + half_dim * 4,
    )

    if half_dim % 128 == 0:
        return pl.pallas_call(
            _sinusoidal_kernel_aligned,
            out_shape=jax.ShapeDtypeStruct((B, dim), out_dtype),
            grid_spec=pltpu.PrefetchScalarGridSpec(
                num_scalar_prefetch=0,
                grid=grid,
                in_specs=in_specs,
                out_specs=pl.BlockSpec((tb, dim), lambda i: (i, 0)),
            ),
            compiler_params=cparams,
            cost_estimate=cost,
        )(t, freq2d)

    sin_half, cos_half = pl.pallas_call(
        _sinusoidal_kernel_split,
        out_shape=(jax.ShapeDtypeStruct((B, half_dim), out_dtype),
                   jax.ShapeDtypeStruct((B, half_dim), out_dtype)),
        grid_spec=pltpu.PrefetchScalarGridSpec(
            num_scalar_prefetch=0,
            grid=grid,
            in_specs=in_specs,
            out_specs=[pl.BlockSpec((tb, half_dim), lambda i: (i, 0)),
                       pl.BlockSpec((tb, half_dim), lambda i: (i, 0))],
        ),
        compiler_params=cparams,
        cost_estimate=cost,
    )(t, freq2d)
    return jnp.concatenate([sin_half, cos_half], axis=-1)


def make_frequencies(dim: int = 512, max_freq: float = 10000.0) -> jax.Array:
    half_dim = dim // 2
    embeddings = math.log(max_freq) / max(half_dim - 1, 1)   # guard half_dim == 1
    return jnp.exp(jnp.arange(half_dim, dtype=jnp.float32) * -embeddings)


if __name__ == "__main__":
    key = jax.random.PRNGKey(0)
    B = 8
    t = jax.random.uniform(key, (B, 1), dtype=jnp.float32) * 100.0

    # Exercise both paths: dim=32 (half_dim=16, split outputs + XLA concat) and
    # dim=256 (half_dim=128, lane-aligned slice stores into a single output).
    for dim in (32, 256):
        frequencies = make_frequencies(dim=dim, max_freq=10000.0)
        out = jax.block_until_ready(sinusoidal_embedding(t, frequencies))
        assert out.shape == (B, dim), out.shape

        # High-precision reference of the module's forward: the f32 product
        # (exactly what the kernel computes) fed into float64 sin/cos.
        t_np = np.asarray(t, dtype=np.float32)
        f_np = np.asarray(frequencies, dtype=np.float32)
        emb = (t_np * f_np[None, :]).astype(np.float64)
        ref = np.concatenate([np.sin(emb), np.cos(emb)], axis=-1)
        assert np.allclose(np.asarray(out, dtype=np.float64), ref,
                           atol=1e-5, rtol=1e-5), f"mismatch at dim={dim}"

    print("KERNEL_OK")
</pallas_src>

<mosaic_0001>
module attributes {stable_mosaic.version = 11 : i64} {
  func.func @_sinusoidal_kernel_split(%arg0: i32, %arg1: memref<8x1xf32, #tpu.memory_space<vmem>>, %arg2: memref<1x16xf32, #tpu.memory_space<vmem>>, %arg3: memref<8x16xf32, #tpu.memory_space<vmem>>, %arg4: memref<8x16xf32, #tpu.memory_space<vmem>>) attributes {dimension_semantics = [#tpu.dimension_semantics<parallel>], iteration_bounds = array<i64: 1>, scalar_prefetch = 0 : i64, scratch_operands = 0 : i64, tpu.core_type = #tpu.core_type<tc>, window_params = [{transform_indices = @transform_0, window_bounds = array<i64: 8, 1>}, {pipeline_mode = #tpu.pipeline_mode<synchronous>, transform_indices = @transform_1, window_bounds = array<i64: 1, 16>}, {transform_indices = @transform_2, window_bounds = array<i64: 8, 16>}, {transform_indices = @transform_3, window_bounds = array<i64: 8, 16>}]} {
    %c0 = arith.constant 0 : index
    %c0_0 = arith.constant 0 : index
    %0 = vector.load %arg1[%c0, %c0_0] : memref<8x1xf32, #tpu.memory_space<vmem>>, vector<8x1xf32>
    %c0_1 = arith.constant 0 : index
    %c0_2 = arith.constant 0 : index
    %1 = vector.load %arg2[%c0_1, %c0_2] : memref<1x16xf32, #tpu.memory_space<vmem>>, vector<1x16xf32>
    %2 = vector.broadcast %0 : vector<8x1xf32> to vector<8x16xf32>
    %3 = vector.broadcast %1 : vector<1x16xf32> to vector<8x16xf32>
    %4 = arith.mulf %2, %3 : vector<8x16xf32>
    %cst = arith.constant 0.636619746 : f32
    %5 = vector.broadcast %cst : f32 to vector<8x16xf32>
    %6 = arith.mulf %4, %5 : vector<8x16xf32>
    %cst_3 = arith.constant 5.000000e-01 : f32
    %7 = vector.broadcast %cst_3 : f32 to vector<8x16xf32>
    %8 = arith.addf %6, %7 : vector<8x16xf32>
    %9 = math.floor %8 : vector<8x16xf32>
    %cst_4 = arith.constant 1.5703125 : f32
    %10 = vector.broadcast %cst_4 : f32 to vector<8x16xf32>
    %11 = arith.mulf %9, %10 : vector<8x16xf32>
    %12 = arith.subf %4, %11 : vector<8x16xf32>
    %cst_5 = arith.constant 4.83751297E-4 : f32
    %13 = vector.broadcast %cst_5 : f32 to vector<8x16xf32>
    %14 = arith.mulf %9, %13 : vector<8x16xf32>
    %15 = arith.subf %12, %14 : vector<8x16xf32>
    %cst_6 = arith.constant 7.549790e-08 : f32
    %16 = vector.broadcast %cst_6 : f32 to vector<8x16xf32>
    %17 = arith.mulf %9, %16 : vector<8x16xf32>
    %18 = arith.subf %15, %17 : vector<8x16xf32>
    %19 = arith.mulf %18, %18 : vector<8x16xf32>
    %20 = arith.mulf %18, %19 : vector<8x16xf32>
    %cst_7 = arith.constant -1.95152956E-4 : f32
    %21 = vector.broadcast %cst_7 : f32 to vector<8x16xf32>
    %22 = arith.mulf %19, %21 : vector<8x16xf32>
    %cst_8 = arith.constant 0.00833216123 : f32
    %23 = vector.broadcast %cst_8 : f32 to vector<8x16xf32>
    %24 = arith.addf %23, %22 : vector<8x16xf32>
    %25 = arith.mulf %19, %24 : vector<8x16xf32>
    %cst_9 = arith.constant -0.166666552 : f32
    %26 = vector.broadcast %cst_9 : f32 to vector<8x16xf32>
    %27 = arith.addf %26, %25 : vector<8x16xf32>
    %28 = arith.mulf %20, %27 : vector<8x16xf32>
    %29 = arith.addf %18, %28 : vector<8x16xf32>
    %cst_10 = arith.constant 5.000000e-01 : f32
    %30 = vector.broadcast %cst_10 : f32 to vector<8x16xf32>
    %31 = arith.mulf %30, %19 : vector<8x16xf32>
    %cst_11 = arith.constant 1.000000e+00 : f32
    %32 = vector.broadcast %cst_11 : f32 to vector<8x16xf32>
    %33 = arith.subf %32, %31 : vector<8x16xf32>
    %34 = arith.mulf %19, %19 : vector<8x16xf32>
    %cst_12 = arith.constant 2.44331568E-5 : f32
    %35 = vector.broadcast %cst_12 : f32 to vector<8x16xf32>
    %36 = arith.mulf %19, %35 : vector<8x16xf32>
    %cst_13 = arith.constant -0.00138873165 : f32
    %37 = vector.broadcast %cst_13 : f32 to vector<8x16xf32>
    %38 = arith.addf %37, %36 : vector<8x16xf32>
    %39 = arith.mulf %19, %38 : vector<8x16xf32>
    %cst_14 = arith.constant 0.0416666456 : f32
    %40 = vector.broadcast %cst_14 : f32 to vector<8x16xf32>
    %41 = arith.addf %40, %39 : vector<8x16xf32>
    %42 = arith.mulf %34, %41 : vector<8x16xf32>
    %43 = arith.addf %33, %42 : vector<8x16xf32>
    %44 = arith.fptosi %9 : vector<8x16xf32> to vector<8x16xi32>
    %c3_i32 = arith.constant 3 : i32
    %45 = vector.broadcast %c3_i32 : i32 to vector<8x16xi32>
    %46 = arith.andi %44, %45 : vector<8x16xi32>
    %c0_i32 = arith.constant 0 : i32
    %47 = vector.broadcast %c0_i32 : i32 to vector<8x16xi32>
    %48 = arith.cmpi eq, %46, %47 : vector<8x16xi32>
    %c1_i32 = arith.constant 1 : i32
    %49 = vector.broadcast %c1_i32 : i32 to vector<8x16xi32>
    %50 = arith.cmpi eq, %46, %49 : vector<8x16xi32>
    %c2_i32 = arith.constant 2 : i32
    %51 = vector.broadcast %c2_i32 : i32 to vector<8x16xi32>
    %52 = arith.cmpi eq, %46, %51 : vector<8x16xi32>
    %cst_15 = arith.constant 0.000000e+00 : f32
    %53 = vector.broadcast %cst_15 : f32 to vector<8x16xf32>
    %54 = arith.subf %53, %29 : vector<8x16xf32>
    %cst_16 = arith.constant 0.000000e+00 : f32
    %55 = vector.broadcast %cst_16 : f32 to vector<8x16xf32>
    %56 = arith.subf %55, %43 : vector<8x16xf32>
    %57 = arith.select %52, %54, %56 : vector<8x16xi1>, vector<8x16xf32>
    %58 = arith.select %50, %43, %57 : vector<8x16xi1>, vector<8x16xf32>
    %59 = arith.select %48, %29, %58 : vector<8x16xi1>, vector<8x16xf32>
    %c0_i32_17 = arith.constant 0 : i32
    %60 = vector.broadcast %c0_i32_17 : i32 to vector<8x16xi32>
    %61 = arith.cmpi eq, %46, %60 : vector<8x16xi32>
    %c1_i32_18 = arith.constant 1 : i32
    %62 = vector.broadcast %c1_i32_18 : i32 to vector<8x16xi32>
    %63 = arith.cmpi eq, %46, %62 : vector<8x16xi32>
    %cst_19 = arith.constant 0.000000e+00 : f32
    %64 = vector.broadcast %cst_19 : f32 to vector<8x16xf32>
    %65 = arith.subf %64, %29 : vector<8x16xf32>
    %c2_i32_20 = arith.constant 2 : i32
    %66 = vector.broadcast %c2_i32_20 : i32 to vector<8x16xi32>
    %67 = arith.cmpi eq, %46, %66 : vector<8x16xi32>
    %cst_21 = arith.constant 0.000000e+00 : f32
    %68 = vector.broadcast %cst_21 : f32 to vector<8x16xf32>
    %69 = arith.subf %68, %43 : vector<8x16xf32>
    %70 = arith.select %67, %69, %29 : vector<8x16xi1>, vector<8x16xf32>
    %71 = arith.select %63, %65, %70 : vector<8x16xi1>, vector<8x16xf32>
    %72 = arith.select %61, %43, %71 : vector<8x16xi1>, vector<8x16xf32>
    %c0_22 = arith.constant 0 : index
    %c0_23 = arith.constant 0 : index
    %73 = vector.load %arg3[%c0_22, %c0_23] : memref<8x16xf32, #tpu.memory_space<vmem>>, vector<8x16xf32>
    tpu.vector_store %arg3[%c0_22, %c0_23], %59 {strides = array<i32>} : memref<8x16xf32, #tpu.memory_space<vmem>>, vector<8x16xf32>,
    %c0_24 = arith.constant 0 : index
    %c0_25 = arith.constant 0 : index
    %74 = vector.load %arg4[%c0_24, %c0_25] : memref<8x16xf32, #tpu.memory_space<vmem>>, vector<8x16xf32>
    tpu.vector_store %arg4[%c0_24, %c0_25], %72 {strides = array<i32>} : memref<8x16xf32, #tpu.memory_space<vmem>>, vector<8x16xf32>,
    return
  }
  func.func @transform_0(%arg0: i32) -> (i32, i32) {
    %c0_i32 = arith.constant 0 : i32
    %c0_i32_0 = arith.constant 0 : i32
    return %arg0, %c0_i32 : i32, i32
  }
  func.func @transform_1(%arg0: i32) -> (i32, i32) {
    %c0_i32 = arith.constant 0 : i32
    %c0_i32_0 = arith.constant 0 : i32
    %c0_i32_1 = arith.constant 0 : i32
    return %c0_i32, %c0_i32_0 : i32, i32
  }
  func.func @transform_2(%arg0: i32) -> (i32, i32) {
    %c0_i32 = arith.constant 0 : i32
    %c0_i32_0 = arith.constant 0 : i32
    return %arg0, %c0_i32 : i32, i32
  }
  func.func @transform_3(%arg0: i32) -> (i32, i32) {
    %c0_i32 = arith.constant 0 : i32
    %c0_i32_0 = arith.constant 0 : i32
    return %arg0, %c0_i32 : i32, i32
  }
}

</mosaic_0001>

<llo_original>
// kernel: tpu_custom_call.1
$region0: #{tpu_custom_call.1}
  #allocation0 [shape = 'u32[]', space=smem, size = 0x4, offset = 0x4, fixed_abs, tag = 'smem constant byte address 0x4 - core index']
  #allocation1 [shape = 'u32[144,128]{1,0:T(1,128)}', space=vmem, size = 0x12000, scoped, tag = 'internal scratch']
  %s0 = inlined_call_operand.vmem [shape: f32[8,1], index: 0, kind: input, shape index: {}]
  %s1 = inlined_call_operand.vmem [shape: f32[1,16], index: 1, kind: input, shape index: {}]
  %s2 = inlined_call_operand.hbm [shape: f32[8,16], index: 2, kind: output, shape index: {0}]
  %s3 = inlined_call_operand.hbm [shape: f32[8,16], index: 3, kind: output, shape index: {1}]
  %4 = xla_tuple %s2, %s3
  %s5 = sld [smem:[#allocation0]]
  $region26: #{tpu_custom_call.1} parent=0
    _
  %s7 = ssub.s32 1, %s5
  %s8 = scalar_select 0, %s7, %s5
  $region1: #{tpu_custom_call.1} parent=0
    #allocation2 [shape = 'u8[4096]{0}', space=vmem, size = 0x1000, scoped, tag = 'output window, operand 0, single buffered']
    #allocation3 [shape = 's32[1]{0}', space=sflag, size = 0x4, scoped, tag = 'scoped memory for tpu_custom_call.1']
    #allocation4 [shape = 'u8[4096]{0}', space=vmem, size = 0x1000, scoped, tag = 'output window, operand 1, single buffered']
    #allocation5 [shape = 's32[1]{0}', space=sflag, size = 0x4, scoped, tag = 'scoped memory for tpu_custom_call.1']
    %9 = vsyncpa [#allocation3], 0
    %10 = vsyncpa [#allocation5], 0
    // Predicated region
    $region2: #{tpu_custom_call.1} parent=1 // pred_check
      _
    $region3: #{tpu_custom_call.1} parent=1 // pred_check_branch
      %12 = sbr.rel (0) target = $region5
    $region4: #{tpu_custom_call.1} parent=1 // pred_region
      _
    $region5: #{tpu_custom_call.1} parent=1 // pred_fallthru
      _
    // Predicated region
    $region6: #{tpu_custom_call.1} parent=1 // pred_check
      _
    $region7: #{tpu_custom_call.1} parent=1 // pred_check_branch
      %14 = sbr.rel (0) target = $region9
    $region8: #{tpu_custom_call.1} parent=1 // pred_region
      _
    $region9: #{tpu_custom_call.1} parent=1 // pred_fallthru
      _
    %v15 = vld [vmem:[%s0] sm:$0xff]
    %v16 = vld [vmem:[%s1] sm:$0x1]
    %18 = vset.pattern.permute.xlu0 0
    %19 = vperm.xlu0 %18, %v15
    %v20 = vpop.permute.xlu0 %19
    %v23 = vlaneseq
    %v24 = vshrl.u32 %v23, 7
    %v25 = vsub.s32 0, %v24
    %v26 = vrot.slane %v16, %v25
    %v28 = vmul.f32 %v20, %v26
    %v29 = vmul.f32 %v28, 0.63661975
    %v30 = vadd.f32 %v29, 0.5
    %v31 = vfloor.f32 %v30
    %v32 = vmul.f32 %v31, 1.5703125
    %v33 = vsub.f32 %v28, %v32
    %v34 = vmul.f32 %v31, 0.0004837513
    %v35 = vsub.f32 %v33, %v34
    %v36 = vmul.f32 %v31, 7.54979e-08
    %v37 = vsub.f32 %v35, %v36
    %v38 = vmul.f32 %v37, %v37
    %v39 = vmul.f32 %v37, %v38
    %v40 = vmul.f32 %v38, -0.00019515296
    %v41 = vadd.f32 %v40, 0.008332161
    %v42 = vmul.f32 %v38, %v41
    %v43 = vadd.f32 %v42, -0.16666655
    %v44 = vmul.f32 %v39, %v43
    %v45 = vadd.f32 %v37, %v44
    %v46 = vmul.f32 %v38, 0.5
    %v47 = vsub.f32 1.0, %v46
    %v48 = vmul.f32 %v38, %v38
    %v49 = vmul.f32 %v38, 2.4433157e-05
    %v50 = vadd.f32 %v49, -0.0013887316
    %v51 = vmul.f32 %v38, %v50
    %v52 = vadd.f32 %v51, 0.041666646
    %v53 = vmul.f32 %v48, %v52
    %v54 = vadd.f32 %v47, %v53
    %v55 = vcvt.f32.s32.to.zero.pseudo %v31
    %v56 = vand.u32 %v55, 3
    %vm57 = vcmp.eq.s32.totalorder %v56, 0
    %vm58 = vcmp.eq.s32.totalorder %v56, 1
    %vm59 = vcmp.eq.s32.totalorder %v56, 2
    %v60 = vsub.f32 0.0, %v45
    %v61 = vsub.f32 0.0, %v54
    %v62 = vsel %vm59, %v60, %v61
    %v63 = vsel %vm58, %v54, %v62
    %v64 = vsel %vm57, %v45, %v63
    %v65 = vsel %vm59, %v61, %v45
    %v66 = vsel %vm58, %v60, %v65
    %v67 = vsel %vm57, %v54, %v66
    %vm68 = vcmask 130048
    %69 = vst.msk [vmem:[#allocation2] sm:$0xff] %vm68, %v64
    %70 = vst.msk [vmem:[#allocation4] sm:$0xff] %vm68, %v67
    // Predicated region
    $region10: #{tpu_custom_call.1} parent=1 // pred_check
      _
    $region11: #{tpu_custom_call.1} parent=1 // pred_check_branch
      %72 = sbr.rel (0) target = $region13
    $region12: #{tpu_custom_call.1} parent=1 // pred_region
      %s74 = ssub.s32 128, 128
      %75 = vsyncadd [#allocation3], %s74
      %s77 = sshll.u32 [#allocation2], 4
      %s78 = int_to_ptr.vmem [resolvable:$true] %s77
      %80 = dma.vmem_to_hbm [thread:$0]  %s78, 128, %s2, [#allocation3]
    $region13: #{tpu_custom_call.1} parent=1 // pred_fallthru
      _
    // Predicated region
    $region14: #{tpu_custom_call.1} parent=1 // pred_check
      _
    $region15: #{tpu_custom_call.1} parent=1 // pred_check_branch
      %82 = sbr.rel (0) target = $region17
    $region16: #{tpu_custom_call.1} parent=1 // pred_region
      %s84 = ssub.s32 128, 128
      %85 = vsyncadd [#allocation5], %s84
      %s87 = sshll.u32 [#allocation4], 4
      %s88 = int_to_ptr.vmem [resolvable:$true] %s87
      %90 = dma.vmem_to_hbm [thread:$0]  %s88, 128, %s3, [#allocation5]
    $region17: #{tpu_custom_call.1} parent=1 // pred_fallthru
      _
    // Predicated region
    $region18: #{tpu_custom_call.1} parent=1 // pred_check
      _
    $region19: #{tpu_custom_call.1} parent=1 // pred_check_branch
      %92 = sbr.rel (0) target = $region21
    $region20: #{tpu_custom_call.1} parent=1 // pred_region
      %93 = dma.done [#allocation3], 128
    $region21: #{tpu_custom_call.1} parent=1 // pred_fallthru
      _
    // Predicated region
    $region22: #{tpu_custom_call.1} parent=1 // pred_check
      _
    $region23: #{tpu_custom_call.1} parent=1 // pred_check_branch
      %95 = sbr.rel (0) target = $region25
    $region24: #{tpu_custom_call.1} parent=1 // pred_region
      %96 = dma.done [#allocation5], 128
    $region25: #{tpu_custom_call.1} parent=1 // pred_fallthru
      _
    %97 = vsyncpa [#allocation3], 1
    %98 = vsyncpa [#allocation5], 1

</llo_original>
